<compile_context>
chip_gen: v6e
topology: v6e:2x2x1
jax: 0.10.0
libtpu: 0.0.40
codegen_flags: <defaults>
</compile_context>

<pallas_src>
import functools
import math

import jax
import jax.numpy as jnp
from jax.experimental import pallas as pl
from jax.experimental.pallas import tpu as pltpu


def resblock_kernel(x_ref, w1_ref, b1_ref, w2_ref, b2_ref, out_ref, *,
                    h_img, wcout):
    """One batch-block per grid step; everything stays in vregs.

    x_ref:   (M, W*Cin)            M = images_per_step * H, channels innermost
    w1_ref:  (3*W*Cin, 2*W*Cout)   [stacked dy bands of conv1 | 1x1 ident cols]
    b1_ref:  (1, W*Cout)           folded BN1 bias, tiled over W
    w2_ref:  (3*W*Cout, W*Cout)    stacked dy bands of conv2
    b2_ref:  (1, W*Cout)           folded BN2 bias, tiled over W
    out_ref: (M, W*Cout)           lane-dense output
    """
    f32 = jnp.float32
    bf16 = jnp.bfloat16
    m = x_ref.shape[0]

    x = x_ref[...]                                              # (M, W*Cin) f32

    # Row index within each image: the dy halo must not cross image boundaries
    # once several images are folded into M (and the roll wrap-around rows are
    # exactly the masked boundary rows).
    row = jax.lax.broadcasted_iota(jnp.int32, (m, 1), 0) % h_img

    def shift_rows(v):
        # XLU sublane rotations (jnp.roll semantics) + VPU boundary zeroing.
        dn = jnp.where(row != 0, pltpu.roll(v, 1, 0), 0.0)          # h <- h-1
        up = jnp.where(row != h_img - 1, pltpu.roll(v, m - 1, 0), 0.0)  # h <- h+1
        return dn, up

    # conv1 + BN1 + relu: single K-fused MXU dot (K = 3*W*Cin, N = 2*W*Cout);
    # the 1x1 identity-shift conv is the extra N columns (only the un-shifted
    # K block has nonzero rows there).
    x_dn, x_up = shift_rows(x)
    lhs1 = jnp.concatenate([x_dn, x, x_up], axis=1).astype(bf16)
    y1 = jnp.dot(lhs1, w1_ref[...], preferred_element_type=f32)  # (M, 2*W*Cout)
    ident = y1[:, wcout:]
    act1 = jnp.maximum(y1[:, :wcout] + b1_ref[...], 0.0)         # (M, W*Cout)

    # conv2 (single K-fused dot), then residual add + BN2 bias after the matmul
    # chain (MRB-friendly on v7x), relu, lane-dense store.
    a_dn, a_up = shift_rows(act1)
    lhs2 = jnp.concatenate([a_dn, act1, a_up], axis=1).astype(bf16)
    y2 = jnp.dot(lhs2, w2_ref[...], preferred_element_type=f32)  # (M, W*Cout)
    out_ref[...] = jnp.maximum(y2 + ident + b2_ref[...], 0.0).astype(out_ref.dtype)


def _round_up(x, m):
    return (x + m - 1) // m * m


def _band_weights(w_hwio, W):
    """(3, 3, Ci, Co) conv weights -> (3, W*Ci, W*Co) banded per-dy matrices.

    A_dy[wi*Ci+ci, wo*Co+co] = w[dy, wi-wo+1, ci, co] for |wi-wo| <= 1, else 0
    (the dx taps and the W-direction SAME zero padding are baked in).
    """
    shifts = [jnp.eye(W, k=1 - dx, dtype=w_hwio.dtype) for dx in range(3)]
    return jnp.stack([
        sum(jnp.kron(shifts[dx], w_hwio[dy, dx]) for dx in range(3))
        for dy in range(3)
    ])


def prepare_resblock_params(w1, b1, w2, b2, wsh, W):
    """One-time weight packing (hoisted out of the per-call path).

    w1: (3,3,Cin,Cout) conv1 (BN1 folded)   b1: (...,Cout) BN1 bias
    w2: (3,3,Cout,Cout) conv2 (BN2 folded)  b2: (...,Cout) BN2 bias
    wsh: (Cin,Cout) 1x1 identity-shift conv
    """
    cin, cout = w1.shape[2], w1.shape[3]
    # Zero-pad channels so W*C is a multiple of 128 (lane-aligned tiles).
    lane_mult = 128 // math.gcd(W, 128)
    cin_p = _round_up(cin, lane_mult)
    cout_p = _round_up(cout, lane_mult)

    f32 = jnp.float32
    w1p = jnp.zeros((3, 3, cin_p, cout_p), f32).at[:, :, :cin, :cout].set(w1)
    w2p = jnp.zeros((3, 3, cout_p, cout_p), f32).at[:, :, :cout, :cout].set(w2)
    wshp = jnp.zeros((cin_p, cout_p), f32).at[:cin, :cout].set(wsh)
    b1p = jnp.zeros((cout_p,), f32).at[:cout].set(b1.reshape(-1))
    b2p = jnp.zeros((cout_p,), f32).at[:cout].set(b2.reshape(-1))

    wcin, wcout = W * cin_p, W * cout_p

    a1 = _band_weights(w1p, W)                             # (3, wcin, wcout)
    a2 = _band_weights(w2p, W)                             # (3, wcout, wcout)
    ash = jnp.kron(jnp.eye(W, dtype=f32), wshp)            # block-diag 1x1 shift

    # K-stacked conv1 bands + identity columns (only the center K block feeds
    # the un-shifted x, so only it carries the 1x1 shift weights).
    w1_bands = jnp.concatenate([a1[0], a1[1], a1[2]], axis=0)          # (3*wcin, wcout)
    ident_cols = jnp.concatenate(
        [jnp.zeros((wcin, wcout), f32), ash, jnp.zeros((wcin, wcout), f32)], axis=0)
    w1_packed = jnp.concatenate([w1_bands, ident_cols], axis=1).astype(jnp.bfloat16)

    w2_packed = jnp.concatenate([a2[0], a2[1], a2[2]], axis=0).astype(jnp.bfloat16)

    b1_row = jnp.tile(b1p, W).reshape(1, wcout)
    b2_row = jnp.tile(b2p, W).reshape(1, wcout)

    return dict(w1=w1_packed, b1=b1_row, w2=w2_packed, b2=b2_row,
                W=W, cin=cin, cout=cout, cin_p=cin_p, cout_p=cout_p)


def resblock_pallas(x_nhwc, params):
    B, H, W, cin = x_nhwc.shape
    assert W == params["W"] and cin == params["cin"]
    cin_p, cout_p, cout = params["cin_p"], params["cout_p"], params["cout"]
    wcin, wcout = W * cin_p, W * cout_p
    dt = x_nhwc.dtype

    # Channel pad (no-op when already lane-aligned) + lane-dense (row, W*C)
    # layout; both are wrapper-side layout plumbing, not compute.
    xp = x_nhwc
    if cin_p != cin:
        xp = jnp.pad(x_nhwc, ((0, 0), (0, 0), (0, 0), (0, cin_p - cin)))
    x2d = xp.reshape(B * H, wcin)

    # Fold several images into the matmul M dimension (target M ~ 256 rows).
    # TODO(synk): for large-B production runs keep grid >= 2*num_cores (v7x).
    bm = min(B, max(1, 256 // H))
    while B % bm:
        bm -= 1
    grid = (B // bm,)
    m_rows = bm * H

    kernel = functools.partial(resblock_kernel, h_img=H, wcout=wcout)

    grid_spec = pltpu.PrefetchScalarGridSpec(
        num_scalar_prefetch=0,
        grid=grid,
        in_specs=[
            pl.BlockSpec((m_rows, wcin), lambda b: (b, 0)),
            pl.BlockSpec((3 * wcin, 2 * wcout), lambda b: (0, 0)),
            pl.BlockSpec((1, wcout), lambda b: (0, 0)),
            pl.BlockSpec((3 * wcout, wcout), lambda b: (0, 0)),
            pl.BlockSpec((1, wcout), lambda b: (0, 0)),
        ],
        out_specs=pl.BlockSpec((m_rows, wcout), lambda b: (b, 0)),
    )

    out2d = pl.pallas_call(
        kernel,
        out_shape=jax.ShapeDtypeStruct((B * H, wcout), dt),
        grid_spec=grid_spec,
        compiler_params=pltpu.CompilerParams(
            dimension_semantics=("parallel",),
            vmem_limit_bytes=32 * 1024 * 1024),
    )(x2d, params["w1"], params["b1"], params["w2"], params["b2"])

    out = out2d.reshape(B, H, W, cout_p)
    return out[..., :cout]


def resblock_ref(x_nhwc, w1, b1, w2, b2, wsh):
    """Pure-JAX f32 reference with identical math (folded eval-mode BN)."""
    dn = ("NHWC", "HWIO", "NHWC")
    y = jax.lax.conv_general_dilated(x_nhwc, w1, (1, 1), "SAME",
                                     dimension_numbers=dn)
    y = jnp.maximum(y + b1, 0.0)
    y = jax.lax.conv_general_dilated(y, w2, (1, 1), "SAME",
                                     dimension_numbers=dn)
    y = y + b2
    ident = jnp.einsum("nhwc,co->nhwo", x_nhwc, wsh)
    return jnp.maximum(y + ident, 0.0)


def _fold_bn(w_hwio, gamma, beta, mean, var, eps=1e-5):
    scale = gamma / jnp.sqrt(var + eps)          # (Cout,)
    w_folded = w_hwio * scale[None, None, None, :]
    bias = (beta - mean * scale).reshape(1, 1, -1)
    return w_folded, bias


if __name__ == "__main__":
    B, Cin, Cout, H, W = 2, 4, 8, 16, 16   # inplanes=4, planes=8 -> shift path active

    key = jax.random.PRNGKey(0)
    ks = jax.random.split(key, 12)

    # PyTorch-style NCHW input, transposed to NHWC for the kernel.
    x_nchw = jax.random.normal(ks[0], (B, Cin, H, W), jnp.float32)
    x_nhwc = jnp.transpose(x_nchw, (0, 2, 3, 1))

    # Deterministic parameter init (synthetic; shapes follow ResBlock.__init__).
    w1 = 0.1 * jax.random.normal(ks[1], (3, 3, Cin, Cout), jnp.float32)   # conv1
    w2 = 0.1 * jax.random.normal(ks[2], (3, 3, Cout, Cout), jnp.float32)  # conv2
    wsh = 0.1 * jax.random.normal(ks[3], (Cin, Cout), jnp.float32)        # 1x1 shift

    gamma1 = 1.0 + 0.1 * jax.random.normal(ks[4], (Cout,), jnp.float32)
    beta1 = 0.1 * jax.random.normal(ks[5], (Cout,), jnp.float32)
    mean1 = 0.1 * jax.random.normal(ks[6], (Cout,), jnp.float32)
    var1 = 0.5 + jnp.abs(jax.random.normal(ks[7], (Cout,), jnp.float32))

    gamma2 = 1.0 + 0.1 * jax.random.normal(ks[8], (Cout,), jnp.float32)
    beta2 = 0.1 * jax.random.normal(ks[9], (Cout,), jnp.float32)
    mean2 = 0.1 * jax.random.normal(ks[10], (Cout,), jnp.float32)
    var2 = 0.5 + jnp.abs(jax.random.normal(ks[11], (Cout,), jnp.float32))

    w1f, b1f = _fold_bn(w1, gamma1, beta1, mean1, var1)
    w2f, b2f = _fold_bn(w2, gamma2, beta2, mean2, var2)

    # One-time weight packing (hoisted out of the forward path).
    params = prepare_resblock_params(w1f, b1f, w2f, b2f, wsh, W)

    out = resblock_pallas(x_nhwc, params)
    out = jax.block_until_ready(out)

    ref = resblock_ref(x_nhwc, w1f, b1f, w2f, b2f, wsh)
    assert out.shape == (B, H, W, Cout)
    # Tolerance loosened for bf16 matmul inputs (accumulation stays f32).
    assert jnp.allclose(out, ref, atol=2e-2, rtol=2e-2), "mismatch vs JAX reference"

    print("KERNEL_OK")
</pallas_src>

<mosaic_0001>
module attributes {stable_mosaic.version = 11 : i64} {
  func.func @resblock_kernel(%arg0: i32, %arg1: memref<32x128xf32, #tpu.memory_space<vmem>>, %arg2: memref<384x256xbf16, #tpu.memory_space<vmem>>, %arg3: memref<1x128xf32, #tpu.memory_space<vmem>>, %arg4: memref<384x128xbf16, #tpu.memory_space<vmem>>, %arg5: memref<1x128xf32, #tpu.memory_space<vmem>>, %arg6: memref<32x128xf32, #tpu.memory_space<vmem>>) attributes {dimension_semantics = [#tpu.dimension_semantics<parallel>], iteration_bounds = array<i64: 1>, scalar_prefetch = 0 : i64, scratch_operands = 0 : i64, tpu.core_type = #tpu.core_type<tc>, window_params = [{transform_indices = @transform_0, window_bounds = array<i64: 32, 128>}, {pipeline_mode = #tpu.pipeline_mode<synchronous>, transform_indices = @transform_1, window_bounds = array<i64: 384, 256>}, {pipeline_mode = #tpu.pipeline_mode<synchronous>, transform_indices = @transform_2, window_bounds = array<i64: 1, 128>}, {pipeline_mode = #tpu.pipeline_mode<synchronous>, transform_indices = @transform_3, window_bounds = array<i64: 384, 128>}, {pipeline_mode = #tpu.pipeline_mode<synchronous>, transform_indices = @transform_4, window_bounds = array<i64: 1, 128>}, {transform_indices = @transform_5, window_bounds = array<i64: 32, 128>}]} {
    %c0 = arith.constant 0 : index
    %c0_0 = arith.constant 0 : index
    %0 = vector.load %arg1[%c0, %c0_0] : memref<32x128xf32, #tpu.memory_space<vmem>>, vector<32x128xf32>
    %1 = tpu.iota {dimensions = array<i32: 0>} : vector<32x1xi32>
    %c16_i32 = arith.constant 16 : i32
    %c0_i32 = arith.constant 0 : i32
    %2 = arith.cmpi eq, %c16_i32, %c0_i32 : i32
    %c1_i32 = arith.constant 1 : i32
    %3 = arith.select %2, %c1_i32, %c16_i32 : i32
    %4 = vector.broadcast %3 : i32 to vector<32x1xi32>
    %5 = arith.remsi %1, %4 : vector<32x1xi32>
    %c0_i32_1 = arith.constant 0 : i32
    %6 = vector.broadcast %c0_i32_1 : i32 to vector<32x1xi32>
    %7 = arith.cmpi ne, %5, %6 : vector<32x1xi32>
    %c0_i32_2 = arith.constant 0 : i32
    %8 = vector.broadcast %c0_i32_2 : i32 to vector<32x1xi32>
    %9 = arith.cmpi slt, %5, %8 : vector<32x1xi32>
    %c0_i32_3 = arith.constant 0 : i32
    %10 = arith.cmpi slt, %3, %c0_i32_3 : i32
    %11 = vector.broadcast %10 : i1 to vector<32x1xi1>
    %12 = vector.broadcast %11 : vector<32x1xi1> to vector<32x1xi1>
    %13 = arith.xori %9, %12 : vector<32x1xi1>
    %14 = arith.andi %13, %7 : vector<32x1xi1>
    %15 = vector.broadcast %3 : i32 to vector<32x1xi32>
    %16 = arith.addi %5, %15 : vector<32x1xi32>
    %17 = arith.select %14, %16, %5 : vector<32x1xi1>, vector<32x1xi32>
    %c0_i32_4 = arith.constant 0 : i32
    %18 = vector.broadcast %c0_i32_4 : i32 to vector<32x1xi32>
    %19 = arith.cmpi ne, %17, %18 : vector<32x1xi32>
    %c1_i32_5 = arith.constant 1 : i32
    %20 = tpu.dynamic_rotate %0 by %c1_i32_5 dim 0 : vector<32x128xf32>, i32 -> vector<32x128xf32>
    %cst = arith.constant 0.000000e+00 : f32
    %21 = vector.shape_cast %19 : vector<32x1xi1> to vector<32x1xi1>
    %22 = vector.broadcast %21 : vector<32x1xi1> to vector<32x128xi1>
    %23 = vector.broadcast %cst : f32 to vector<32x128xf32>
    %24 = arith.select %22, %20, %23 : vector<32x128xi1>, vector<32x128xf32>
    %c15_i32 = arith.constant 15 : i32
    %25 = vector.broadcast %c15_i32 : i32 to vector<32x1xi32>
    %26 = arith.cmpi ne, %17, %25 : vector<32x1xi32>
    %c31_i32 = arith.constant 31 : i32
    %27 = tpu.dynamic_rotate %0 by %c31_i32 dim 0 : vector<32x128xf32>, i32 -> vector<32x128xf32>
    %cst_6 = arith.constant 0.000000e+00 : f32
    %28 = vector.shape_cast %26 : vector<32x1xi1> to vector<32x1xi1>
    %29 = vector.broadcast %28 : vector<32x1xi1> to vector<32x128xi1>
    %30 = vector.broadcast %cst_6 : f32 to vector<32x128xf32>
    %31 = arith.select %29, %27, %30 : vector<32x128xi1>, vector<32x128xf32>
    %32 = tpu.concatenate %24, %0, %31 in 1 : vector<32x128xf32>, vector<32x128xf32>, vector<32x128xf32> -> vector<32x384xf32>
    %33 = arith.truncf %32 : vector<32x384xf32> to vector<32x384xbf16>
    %c0_7 = arith.constant 0 : index
    %c0_8 = arith.constant 0 : index
    %34 = vector.load %arg2[%c0_7, %c0_8] : memref<384x256xbf16, #tpu.memory_space<vmem>>, vector<384x256xbf16>
    %cst_9 = arith.constant dense<0.000000e+00> : vector<32x256xf32>
    %35 = tpu.matmul %33, %34, %cst_9 {dimension_numbers = #tpu.dot_dimension_numbers<[1], [0], [0], [1], [0, 0, 1, 1], [], []>} : vector<32x384xbf16>, vector<384x256xbf16>, vector<32x256xf32> -> vector<32x256xf32>
    %36 = vector.extract_strided_slice %35 {offsets = [0, 128], sizes = [32, 128], strides = [1, 1]} : vector<32x256xf32> to vector<32x128xf32>
    %37 = vector.extract_strided_slice %35 {offsets = [0, 0], sizes = [32, 128], strides = [1, 1]} : vector<32x256xf32> to vector<32x128xf32>
    %c0_10 = arith.constant 0 : index
    %c0_11 = arith.constant 0 : index
    %38 = vector.load %arg3[%c0_10, %c0_11] : memref<1x128xf32, #tpu.memory_space<vmem>>, vector<1x128xf32>
    %39 = vector.broadcast %38 : vector<1x128xf32> to vector<32x128xf32>
    %40 = arith.addf %37, %39 : vector<32x128xf32>
    %cst_12 = arith.constant 0.000000e+00 : f32
    %41 = vector.broadcast %cst_12 : f32 to vector<32x128xf32>
    %42 = arith.maximumf %40, %41 : vector<32x128xf32>
    %c0_i32_13 = arith.constant 0 : i32
    %43 = vector.broadcast %c0_i32_13 : i32 to vector<32x1xi32>
    %44 = arith.cmpi ne, %17, %43 : vector<32x1xi32>
    %c1_i32_14 = arith.constant 1 : i32
    %45 = tpu.dynamic_rotate %42 by %c1_i32_14 dim 0 : vector<32x128xf32>, i32 -> vector<32x128xf32>
    %cst_15 = arith.constant 0.000000e+00 : f32
    %46 = vector.shape_cast %44 : vector<32x1xi1> to vector<32x1xi1>
    %47 = vector.broadcast %46 : vector<32x1xi1> to vector<32x128xi1>
    %48 = vector.broadcast %cst_15 : f32 to vector<32x128xf32>
    %49 = arith.select %47, %45, %48 : vector<32x128xi1>, vector<32x128xf32>
    %c15_i32_16 = arith.constant 15 : i32
    %50 = vector.broadcast %c15_i32_16 : i32 to vector<32x1xi32>
    %51 = arith.cmpi ne, %17, %50 : vector<32x1xi32>
    %c31_i32_17 = arith.constant 31 : i32
    %52 = tpu.dynamic_rotate %42 by %c31_i32_17 dim 0 : vector<32x128xf32>, i32 -> vector<32x128xf32>
    %cst_18 = arith.constant 0.000000e+00 : f32
    %53 = vector.shape_cast %51 : vector<32x1xi1> to vector<32x1xi1>
    %54 = vector.broadcast %53 : vector<32x1xi1> to vector<32x128xi1>
    %55 = vector.broadcast %cst_18 : f32 to vector<32x128xf32>
    %56 = arith.select %54, %52, %55 : vector<32x128xi1>, vector<32x128xf32>
    %57 = tpu.concatenate %49, %42, %56 in 1 : vector<32x128xf32>, vector<32x128xf32>, vector<32x128xf32> -> vector<32x384xf32>
    %58 = arith.truncf %57 : vector<32x384xf32> to vector<32x384xbf16>
    %c0_19 = arith.constant 0 : index
    %c0_20 = arith.constant 0 : index
    %59 = vector.load %arg4[%c0_19, %c0_20] : memref<384x128xbf16, #tpu.memory_space<vmem>>, vector<384x128xbf16>
    %cst_21 = arith.constant dense<0.000000e+00> : vector<32x128xf32>
    %60 = tpu.matmul %58, %59, %cst_21 {dimension_numbers = #tpu.dot_dimension_numbers<[1], [0], [0], [1], [0, 0, 1, 1], [], []>} : vector<32x384xbf16>, vector<384x128xbf16>, vector<32x128xf32> -> vector<32x128xf32>
    %61 = arith.addf %60, %36 : vector<32x128xf32>
    %c0_22 = arith.constant 0 : index
    %c0_23 = arith.constant 0 : index
    %62 = vector.load %arg5[%c0_22, %c0_23] : memref<1x128xf32, #tpu.memory_space<vmem>>, vector<1x128xf32>
    %63 = vector.broadcast %62 : vector<1x128xf32> to vector<32x128xf32>
    %64 = arith.addf %61, %63 : vector<32x128xf32>
    %cst_24 = arith.constant 0.000000e+00 : f32
    %65 = vector.broadcast %cst_24 : f32 to vector<32x128xf32>
    %66 = arith.maximumf %64, %65 : vector<32x128xf32>
    %c0_25 = arith.constant 0 : index
    %c0_26 = arith.constant 0 : index
    %67 = vector.load %arg6[%c0_25, %c0_26] : memref<32x128xf32, #tpu.memory_space<vmem>>, vector<32x128xf32>
    tpu.vector_store %arg6[%c0_25, %c0_26], %66 {strides = array<i32>} : memref<32x128xf32, #tpu.memory_space<vmem>>, vector<32x128xf32>,
    return
  }
  func.func @transform_0(%arg0: i32) -> (i32, i32) {
    %c0_i32 = arith.constant 0 : i32
    %c0_i32_0 = arith.constant 0 : i32
    return %arg0, %c0_i32 : i32, i32
  }
  func.func @transform_1(%arg0: i32) -> (i32, i32) {
    %c0_i32 = arith.constant 0 : i32
    %c0_i32_0 = arith.constant 0 : i32
    %c0_i32_1 = arith.constant 0 : i32
    return %c0_i32, %c0_i32_0 : i32, i32
  }
  func.func @transform_2(%arg0: i32) -> (i32, i32) {
    %c0_i32 = arith.constant 0 : i32
    %c0_i32_0 = arith.constant 0 : i32
    %c0_i32_1 = arith.constant 0 : i32
    return %c0_i32, %c0_i32_0 : i32, i32
  }
  func.func @transform_3(%arg0: i32) -> (i32, i32) {
    %c0_i32 = arith.constant 0 : i32
    %c0_i32_0 = arith.constant 0 : i32
    %c0_i32_1 = arith.constant 0 : i32
    return %c0_i32, %c0_i32_0 : i32, i32
  }
  func.func @transform_4(%arg0: i32) -> (i32, i32) {
    %c0_i32 = arith.constant 0 : i32
    %c0_i32_0 = arith.constant 0 : i32
    %c0_i32_1 = arith.constant 0 : i32
    return %c0_i32, %c0_i32_0 : i32, i32
  }
  func.func @transform_5(%arg0: i32) -> (i32, i32) {
    %c0_i32 = arith.constant 0 : i32
    %c0_i32_0 = arith.constant 0 : i32
    return %arg0, %c0_i32 : i32, i32
  }
}

</mosaic_0001>

<llo_original>
// kernel: tpu_custom_call.1
$region0: #{tpu_custom_call.1}
  #allocation0 [shape = 'u32[]', space=smem, size = 0x4, offset = 0x4, fixed_abs, tag = 'smem constant byte address 0x4 - core index']
  #allocation1 [shape = 'u32[144,128]{1,0:T(1,128)}', space=vmem, size = 0x12000, scoped, tag = 'internal scratch']
  %s0 = inlined_call_operand.hbm [shape: f32[32,128], index: 0, kind: input, shape index: {}]
  %s1 = inlined_call_operand.hbm [shape: bf16[384,256], index: 1, kind: input, shape index: {}]
  %s2 = inlined_call_operand.vmem [shape: f32[1,128], index: 2, kind: input, shape index: {}]
  %s3 = inlined_call_operand.hbm [shape: bf16[384,128], index: 3, kind: input, shape index: {}]
  %s4 = inlined_call_operand.vmem [shape: f32[1,128], index: 4, kind: input, shape index: {}]
  %s5 = inlined_call_operand.hbm [shape: f32[32,128], index: 5, kind: output, shape index: {}]
  %s6 = sld [smem:[#allocation0]]
  $region42: #{tpu_custom_call.1} parent=0
    _
  %s8 = ssub.s32 1, %s6
  %s9 = scalar_select 0, %s8, %s6
  $region1: #{tpu_custom_call.1} parent=0
    #allocation2 [shape = 'u8[16384]{0}', space=vmem, size = 0x4000, scoped, tag = 'input window, operand 0, single buffered']
    #allocation3 [shape = 's32[1]{0}', space=sflag, size = 0x4, scoped, tag = 'scoped memory for tpu_custom_call.1']
    #allocation4 [shape = 's32[1]{0}', space=sflag, size = 0x4, scoped, tag = 'scoped memory for tpu_custom_call.1']
    #allocation5 [shape = 'u8[196608]{0}', space=vmem, size = 0x30000, scoped, tag = 'input window, operand 1, single buffered']
    #allocation6 [shape = 's32[1]{0}', space=sflag, size = 0x4, scoped, tag = 'scoped memory for tpu_custom_call.1']
    #allocation7 [shape = 'u8[98304]{0}', space=vmem, size = 0x18000, scoped, tag = 'input window, operand 3, single buffered']
    #allocation8 [shape = 'u8[16384]{0}', space=vmem, size = 0x4000, scoped, tag = 'output window, operand 0, single buffered']
    %10 = vsyncpa [#allocation3], 0
    %11 = vsyncpa [#allocation6], 0
    %12 = vsyncpa [#allocation4], 0
    // Predicated region
    $region2: #{tpu_custom_call.1} parent=1 // pred_check
      _
    $region3: #{tpu_custom_call.1} parent=1 // pred_check_branch
      %14 = sbr.rel (0) target = $region5
    $region4: #{tpu_custom_call.1} parent=1 // pred_region
      %s16 = ssub.s32 512, 512
      %17 = vsyncadd [#allocation3], %s16
      %s18 = sshll.u32 [#allocation2], 4
      %s19 = int_to_ptr.vmem [resolvable:$true] %s18
      %24 = dma.hbm_to_vmem [thread:$0]  %s0, 512, %s19, [#allocation3], 128, 128, 8
    $region5: #{tpu_custom_call.1} parent=1 // pred_fallthru
      _
    // Predicated region
    $region6: #{tpu_custom_call.1} parent=1 // pred_check
      _
    $region7: #{tpu_custom_call.1} parent=1 // pred_check_branch
      %26 = sbr.rel (0) target = $region9
    $region8: #{tpu_custom_call.1} parent=1 // pred_region
      %s28 = ssub.s32 6144, 6144
      %29 = vsyncadd [#allocation6], %s28
      %s30 = sshll.u32 [#allocation5], 4
      %s31 = int_to_ptr.vmem [resolvable:$true] %s30
      %36 = dma.hbm_to_vmem [thread:$0]  %s1, 6144, %s31, [#allocation6], 128, 128, 8
    $region9: #{tpu_custom_call.1} parent=1 // pred_fallthru
      _
    // Predicated region
    $region10: #{tpu_custom_call.1} parent=1 // pred_check
      _
    $region11: #{tpu_custom_call.1} parent=1 // pred_check_branch
      %38 = sbr.rel (0) target = $region13
    $region12: #{tpu_custom_call.1} parent=1 // pred_region
      _
    $region13: #{tpu_custom_call.1} parent=1 // pred_fallthru
      _
    // Predicated region
    $region14: #{tpu_custom_call.1} parent=1 // pred_check
      _
    $region15: #{tpu_custom_call.1} parent=1 // pred_check_branch
      %40 = sbr.rel (0) target = $region17
    $region16: #{tpu_custom_call.1} parent=1 // pred_region
      %s42 = ssub.s32 3072, 3072
      %43 = vsyncadd [#allocation6], %s42
      %s44 = sshll.u32 [#allocation7], 4
      %s45 = int_to_ptr.vmem [resolvable:$true] %s44
      %50 = dma.hbm_to_vmem [thread:$0]  %s3, 3072, %s45, [#allocation6], 64, 64, 4
    $region17: #{tpu_custom_call.1} parent=1 // pred_fallthru
      _
    // Predicated region
    $region18: #{tpu_custom_call.1} parent=1 // pred_check
      _
    $region19: #{tpu_custom_call.1} parent=1 // pred_check_branch
      %52 = sbr.rel (0) target = $region21
    $region20: #{tpu_custom_call.1} parent=1 // pred_region
      _
    $region21: #{tpu_custom_call.1} parent=1 // pred_fallthru
      _
    // Predicated region
    $region22: #{tpu_custom_call.1} parent=1 // pred_check
      _
    $region23: #{tpu_custom_call.1} parent=1 // pred_check_branch
      %54 = sbr.rel (0) target = $region25
    $region24: #{tpu_custom_call.1} parent=1 // pred_region
      %55 = dma.done [#allocation3], 512
    $region25: #{tpu_custom_call.1} parent=1 // pred_fallthru
      _
    // Predicated region
    $region26: #{tpu_custom_call.1} parent=1 // pred_check
      _
    $region27: #{tpu_custom_call.1} parent=1 // pred_check_branch
      %57 = sbr.rel (0) target = $region29
    $region28: #{tpu_custom_call.1} parent=1 // pred_region
      %58 = dma.done [#allocation6], 6144
    $region29: #{tpu_custom_call.1} parent=1 // pred_fallthru
      _
    // Predicated region
    $region30: #{tpu_custom_call.1} parent=1 // pred_check
      _
    $region31: #{tpu_custom_call.1} parent=1 // pred_check_branch
      %60 = sbr.rel (0) target = $region33
    $region32: #{tpu_custom_call.1} parent=1 // pred_region
      %61 = dma.done [#allocation6], 3072
    $region33: #{tpu_custom_call.1} parent=1 // pred_fallthru
      _
    %v63 = vld [vmem:[#allocation2] sm:$0xff]
    %v64 = vld [vmem:[#allocation2 + $0x8] sm:$0xff]
    %v65 = vld [vmem:[#allocation2 + $0x10] sm:$0xff]
    %v66 = vld [vmem:[#allocation2 + $0x18] sm:$0xff]
    %v67 = vlaneseq
    %v68 = vshrl.u32 %v67, 7
    %v69 = vadd.s32 %v68, 8
    %v70 = vadd.s32 %v68, 16
    %v71 = vadd.s32 %v68, 24
    %vm72 = vcmp.lt.s32.totalorder %v68, 0
    %v73 = vsub.s32 0, %v68
    %v74 = vsel %vm72, %v73, %v68
    %v75 = vshrl.u32 %v74, 4
    %v76 = vand.u32 %v74, 15
    %v77 = vsub.s32 0, %v76
    %v78 = vsel %vm72, %v77, %v76
    %vm79 = vcmp.lt.s32.totalorder %v69, 0
    %v80 = vsub.s32 0, %v69
    %v81 = vsel %vm79, %v80, %v69
    %v82 = vshrl.u32 %v81, 4
    %v83 = vand.u32 %v81, 15
    %v84 = vsub.s32 0, %v83
    %v85 = vsel %vm79, %v84, %v83
    %vm86 = vcmp.lt.s32.totalorder %v70, 0
    %v87 = vsub.s32 0, %v70
    %v88 = vsel %vm86, %v87, %v70
    %v89 = vshrl.u32 %v88, 4
    %v90 = vand.u32 %v88, 15
    %v91 = vsub.s32 0, %v90
    %v92 = vsel %vm86, %v91, %v90
    %vm93 = vcmp.lt.s32.totalorder %v71, 0
    %v94 = vsub.s32 0, %v71
    %v95 = vsel %vm93, %v94, %v71
    %v96 = vshrl.u32 %v95, 4
    %v97 = vand.u32 %v95, 15
    %v98 = vsub.s32 0, %v97
    %v99 = vsel %vm93, %v98, %v97
    %vm100 = vcmp.ne.s32.totalorder %v78, 0
    %vm101 = vcmp.ne.s32.totalorder %v85, 0
    %vm102 = vcmp.ne.s32.totalorder %v92, 0
    %vm103 = vcmp.ne.s32.totalorder %v99, 0
    %vm104 = vcmp.lt.s32.totalorder %v78, 0
    %vm105 = vcmp.lt.s32.totalorder %v85, 0
    %vm106 = vcmp.lt.s32.totalorder %v92, 0
    %vm107 = vcmp.lt.s32.totalorder %v99, 0
    %vm108 = vmand %vm104, %vm100
    %vm109 = vmand %vm105, %vm101
    %vm110 = vmand %vm106, %vm102
    %vm111 = vmand %vm107, %vm103
    %v112 = vadd.s32 %v78, 16
    %v113 = vadd.s32 %v85, 16
    %v114 = vadd.s32 %v92, 16
    %v115 = vadd.s32 %v99, 16
    %v116 = vsel %vm108, %v112, %v78
    %v117 = vsel %vm109, %v113, %v85
    %v118 = vsel %vm110, %v114, %v92
    %v119 = vsel %vm111, %v115, %v99
    %vm120 = vcmp.ne.s32.totalorder %v116, 0
    %vm121 = vcmp.ne.s32.totalorder %v117, 0
    %vm122 = vcmp.ne.s32.totalorder %v118, 0
    %vm123 = vcmp.ne.s32.totalorder %v119, 0
    %v124 = vrot.slane %v63, 7
    %v125 = vrot.slane %v64, 7
    %v126 = vrot.slane %v65, 7
    %v127 = vrot.slane %v66, 7
    %vm128 = vcmp.lt.s32.totalorder %v68, 1
    %v129 = vsel %vm128, %v126, %v127
    %v130 = vsel %vm128, %v125, %v126
    %v131 = vsel %vm128, %v124, %v125
    %v132 = vsel %vm128, %v127, %v124
    %v133 = vsel %vm120, 1, 0
    %v134 = vsel %vm121, 1, 0
    %v135 = vsel %vm122, 1, 0
    %v136 = vsel %vm123, 1, 0
    %vm137 = vcmp.eq.s32.totalorder %v133, 1
    %vm138 = vcmp.eq.s32.totalorder %v134, 1
    %vm139 = vcmp.eq.s32.totalorder %v135, 1
    %vm140 = vcmp.eq.s32.totalorder %v136, 1
    %v141 = vsel %vm137, %v132, 0.0
    %v142 = vsel %vm138, %v131, 0.0
    %v143 = vsel %vm139, %v130, 0.0
    %v144 = vsel %vm140, %v129, 0.0
    %vm145 = vcmp.ne.s32.totalorder %v116, 15
    %vm146 = vcmp.ne.s32.totalorder %v117, 15
    %vm147 = vcmp.ne.s32.totalorder %v118, 15
    %vm148 = vcmp.ne.s32.totalorder %v119, 15
    %v149 = vrot.slane %v63, 1
    %v150 = vrot.slane %v64, 1
    %v151 = vrot.slane %v65, 1
    %v152 = vrot.slane %v66, 1
    %vm153 = vcmp.lt.s32.totalorder %v68, 7
    %v154 = vsel %vm153, %v151, %v152
    %v155 = vsel %vm153, %v150, %v151
    %v156 = vsel %vm153, %v149, %v150
    %v157 = vsel %vm153, %v152, %v149
    %v158 = vsel %vm145, 1, 0
    %v159 = vsel %vm146, 1, 0
    %v160 = vsel %vm147, 1, 0
    %v161 = vsel %vm148, 1, 0
    %vm162 = vcmp.eq.s32.totalorder %v158, 1
    %vm163 = vcmp.eq.s32.totalorder %v159, 1
    %vm164 = vcmp.eq.s32.totalorder %v160, 1
    %vm165 = vcmp.eq.s32.totalorder %v161, 1
    %v166 = vsel %vm162, %v156, 0.0
    %v167 = vsel %vm163, %v155, 0.0
    %v168 = vsel %vm164, %v154, 0.0
    %v169 = vsel %vm165, %v157, 0.0
    %v170 = vpack.c.bf16 %v142, %v141
    %v171 = vpack.c.bf16 %v64, %v63
    %v172 = vpack.c.bf16 %v167, %v166
    %v173 = vpack.c.bf16 %v144, %v143
    %v174 = vpack.c.bf16 %v66, %v65
    %v175 = vpack.c.bf16 %v169, %v168
    %v176 = vld [vmem:[#allocation5] sm:$0xff]
    %v177 = vld [vmem:[#allocation5 + $0x8] sm:$0xff]
    %v178 = vld [vmem:[#allocation5 + $0x10] sm:$0xff]
    %v179 = vld [vmem:[#allocation5 + $0x18] sm:$0xff]
    %v180 = vld [vmem:[#allocation5 + $0x20] sm:$0xff]
    %v181 = vld [vmem:[#allocation5 + $0x28] sm:$0xff]
    %v182 = vld [vmem:[#allocation5 + $0x30] sm:$0xff]
    %v183 = vld [vmem:[#allocation5 + $0x38] sm:$0xff]
    %v184 = vld [vmem:[#allocation5 + $0x40] sm:$0xff]
    %v185 = vld [vmem:[#allocation5 + $0x48] sm:$0xff]
    %v186 = vld [vmem:[#allocation5 + $0x50] sm:$0xff]
    %v187 = vld [vmem:[#allocation5 + $0x58] sm:$0xff]
    %v188 = vld [vmem:[#allocation5 + $0x60] sm:$0xff]
    %v189 = vld [vmem:[#allocation5 + $0x68] sm:$0xff]
    %v190 = vld [vmem:[#allocation5 + $0x70] sm:$0xff]
    %v191 = vld [vmem:[#allocation5 + $0x78] sm:$0xff]
    %v192 = vld [vmem:[#allocation5 + $0x80] sm:$0xff]
    %v193 = vld [vmem:[#allocation5 + $0x88] sm:$0xff]
    %v194 = vld [vmem:[#allocation5 + $0x90] sm:$0xff]
    %v195 = vld [vmem:[#allocation5 + $0x98] sm:$0xff]
    %v196 = vld [vmem:[#allocation5 + $0xa0] sm:$0xff]
    %v197 = vld [vmem:[#allocation5 + $0xa8] sm:$0xff]
    %v198 = vld [vmem:[#allocation5 + $0xb0] sm:$0xff]
    %v199 = vld [vmem:[#allocation5 + $0xb8] sm:$0xff]
    %v200 = vld [vmem:[#allocation5 + $0xc0] sm:$0xff]
    %v201 = vld [vmem:[#allocation5 + $0xc8] sm:$0xff]
    %v202 = vld [vmem:[#allocation5 + $0xd0] sm:$0xff]
    %v203 = vld [vmem:[#allocation5 + $0xd8] sm:$0xff]
    %v204 = vld [vmem:[#allocation5 + $0xe0] sm:$0xff]
    %v205 = vld [vmem:[#allocation5 + $0xe8] sm:$0xff]
    %v206 = vld [vmem:[#allocation5 + $0xf0] sm:$0xff]
    %v207 = vld [vmem:[#allocation5 + $0xf8] sm:$0xff]
    %v208 = vld [vmem:[#allocation5 + $0x100] sm:$0xff]
    %v209 = vld [vmem:[#allocation5 + $0x108] sm:$0xff]
    %v210 = vld [vmem:[#allocation5 + $0x110] sm:$0xff]
    %v211 = vld [vmem:[#allocation5 + $0x118] sm:$0xff]
    %v212 = vld [vmem:[#allocation5 + $0x120] sm:$0xff]
    %v213 = vld [vmem:[#allocation5 + $0x128] sm:$0xff]
    %v214 = vld [vmem:[#allocation5 + $0x130] sm:$0xff]
    %v215 = vld [vmem:[#allocation5 + $0x138] sm:$0xff]
    %v216 = vld [vmem:[#allocation5 + $0x140] sm:$0xff]
    %v217 = vld [vmem:[#allocation5 + $0x148] sm:$0xff]
    %v218 = vld [vmem:[#allocation5 + $0x150] sm:$0xff]
    %v219 = vld [vmem:[#allocation5 + $0x158] sm:$0xff]
    %v220 = vld [vmem:[#allocation5 + $0x160] sm:$0xff]
    %v221 = vld [vmem:[#allocation5 + $0x168] sm:$0xff]
    %v222 = vld [vmem:[#allocation5 + $0x170] sm:$0xff]
    %v223 = vld [vmem:[#allocation5 + $0x178] sm:$0xff]
    %v272 = vunpack.c.l.b16 %v176
    %v273 = vunpack.c.h.b16 %v176
    %v274 = vunpack.c.l.b16 %v177
    %v275 = vunpack.c.h.b16 %v177
    %v276 = vunpack.c.l.b16 %v178
    %v277 = vunpack.c.h.b16 %v178
    %v278 = vunpack.c.l.b16 %v179
    %v279 = vunpack.c.h.b16 %v179
    %v280 = vunpack.c.l.b16 %v180
    %v281 = vunpack.c.h.b16 %v180
    %v282 = vunpack.c.l.b16 %v181
    %v283 = vunpack.c.h.b16 %v181
    %v284 = vunpack.c.l.b16 %v182
    %v285 = vunpack.c.h.b16 %v182
    %v286 = vunpack.c.l.b16 %v183
    %v287 = vunpack.c.h.b16 %v183
    %v288 = vunpack.c.l.b16 %v184
    %v289 = vunpack.c.h.b16 %v184
    %v290 = vunpack.c.l.b16 %v185
    %v291 = vunpack.c.h.b16 %v185
    %v292 = vunpack.c.l.b16 %v186
    %v293 = vunpack.c.h.b16 %v186
    %v294 = vunpack.c.l.b16 %v187
    %v295 = vunpack.c.h.b16 %v187
    %v296 = vunpack.c.l.b16 %v188
    %v297 = vunpack.c.h.b16 %v188
    %v298 = vunpack.c.l.b16 %v189
    %v299 = vunpack.c.h.b16 %v189
    %v300 = vunpack.c.l.b16 %v190
    %v301 = vunpack.c.h.b16 %v190
    %v302 = vunpack.c.l.b16 %v191
    %v303 = vunpack.c.h.b16 %v191
    %v304 = vunpack.c.l.b16 %v192
    %v305 = vunpack.c.h.b16 %v192
    %v306 = vunpack.c.l.b16 %v193
    %v307 = vunpack.c.h.b16 %v193
    %v308 = vunpack.c.l.b16 %v194
    %v309 = vunpack.c.h.b16 %v194
    %v310 = vunpack.c.l.b16 %v195
    %v311 = vunpack.c.h.b16 %v195
    %v312 = vunpack.c.l.b16 %v196
    %v313 = vunpack.c.h.b16 %v196
    %v314 = vunpack.c.l.b16 %v197
    %v315 = vunpack.c.h.b16 %v197
    %v316 = vunpack.c.l.b16 %v198
    %v317 = vunpack.c.h.b16 %v198
    %v318 = vunpack.c.l.b16 %v199
    %v319 = vunpack.c.h.b16 %v199
    %v320 = vunpack.c.l.b16 %v200
    %v321 = vunpack.c.h.b16 %v200
    %v322 = vunpack.c.l.b16 %v201
    %v323 = vunpack.c.h.b16 %v201
    %v324 = vunpack.c.l.b16 %v202
    %v325 = vunpack.c.h.b16 %v202
    %v326 = vunpack.c.l.b16 %v203
    %v327 = vunpack.c.h.b16 %v203
    %v328 = vunpack.c.l.b16 %v204
    %v329 = vunpack.c.h.b16 %v204
    %v330 = vunpack.c.l.b16 %v205
    %v331 = vunpack.c.h.b16 %v205
    %v332 = vunpack.c.l.b16 %v206
    %v333 = vunpack.c.h.b16 %v206
    %v334 = vunpack.c.l.b16 %v207
    %v335 = vunpack.c.h.b16 %v207
    %v336 = vunpack.c.l.b16 %v208
    %v337 = vunpack.c.h.b16 %v208
    %v338 = vunpack.c.l.b16 %v209
    %v339 = vunpack.c.h.b16 %v209
    %v340 = vunpack.c.l.b16 %v210
    %v341 = vunpack.c.h.b16 %v210
    %v342 = vunpack.c.l.b16 %v211
    %v343 = vunpack.c.h.b16 %v211
    %v344 = vunpack.c.l.b16 %v212
    %v345 = vunpack.c.h.b16 %v212
    %v346 = vunpack.c.l.b16 %v213
    %v347 = vunpack.c.h.b16 %v213
    %v348 = vunpack.c.l.b16 %v214
    %v349 = vunpack.c.h.b16 %v214
    %v350 = vunpack.c.l.b16 %v215
    %v351 = vunpack.c.h.b16 %v215
    %v352 = vunpack.c.l.b16 %v216
    %v353 = vunpack.c.h.b16 %v216
    %v354 = vunpack.c.l.b16 %v217
    %v355 = vunpack.c.h.b16 %v217
    %v356 = vunpack.c.l.b16 %v218
    %v357 = vunpack.c.h.b16 %v218
    %v358 = vunpack.c.l.b16 %v219
    %v359 = vunpack.c.h.b16 %v219
    %v360 = vunpack.c.l.b16 %v220
    %v361 = vunpack.c.h.b16 %v220
    %v362 = vunpack.c.l.b16 %v221
    %v363 = vunpack.c.h.b16 %v221
    %v364 = vunpack.c.l.b16 %v222
    %v365 = vunpack.c.h.b16 %v222
    %v366 = vunpack.c.l.b16 %v223
    %v367 = vunpack.c.h.b16 %v223
    %v368 = vpack.c.b16 %v274, %v272
    %v369 = vpack.c.b16 %v275, %v273
    %v370 = vpack.c.b16 %v278, %v276
    %v371 = vpack.c.b16 %v279, %v277
    %v372 = vpack.c.b16 %v282, %v280
    %v373 = vpack.c.b16 %v283, %v281
    %v374 = vpack.c.b16 %v286, %v284
    %v375 = vpack.c.b16 %v287, %v285
    %v376 = vpack.c.b16 %v290, %v288
    %v377 = vpack.c.b16 %v291, %v289
    %v378 = vpack.c.b16 %v294, %v292
    %v379 = vpack.c.b16 %v295, %v293
    %v380 = vpack.c.b16 %v298, %v296
    %v381 = vpack.c.b16 %v299, %v297
    %v382 = vpack.c.b16 %v302, %v300
    %v383 = vpack.c.b16 %v303, %v301
    %v384 = vpack.c.b16 %v306, %v304
    %v385 = vpack.c.b16 %v307, %v305
    %v386 = vpack.c.b16 %v310, %v308
    %v387 = vpack.c.b16 %v311, %v309
    %v388 = vpack.c.b16 %v314, %v312
    %v389 = vpack.c.b16 %v315, %v313
    %v390 = vpack.c.b16 %v318, %v316
    %v391 = vpack.c.b16 %v319, %v317
    %v392 = vpack.c.b16 %v322, %v320
    %v393 = vpack.c.b16 %v323, %v321
    %v394 = vpack.c.b16 %v326, %v324
    %v395 = vpack.c.b16 %v327, %v325
    %v396 = vpack.c.b16 %v330, %v328
    %v397 = vpack.c.b16 %v331, %v329
    %v398 = vpack.c.b16 %v334, %v332
    %v399 = vpack.c.b16 %v335, %v333
    %v400 = vpack.c.b16 %v338, %v336
    %v401 = vpack.c.b16 %v339, %v337
    %v402 = vpack.c.b16 %v342, %v340
    %v403 = vpack.c.b16 %v343, %v341
    %v404 = vpack.c.b16 %v346, %v344
    %v405 = vpack.c.b16 %v347, %v345
    %v406 = vpack.c.b16 %v350, %v348
    %v407 = vpack.c.b16 %v351, %v349
    %v408 = vpack.c.b16 %v354, %v352
    %v409 = vpack.c.b16 %v355, %v353
    %v410 = vpack.c.b16 %v358, %v356
    %v411 = vpack.c.b16 %v359, %v357
    %v412 = vpack.c.b16 %v362, %v360
    %v413 = vpack.c.b16 %v363, %v361
    %v414 = vpack.c.b16 %v366, %v364
    %v415 = vpack.c.b16 %v367, %v365
    %464 = vmatprep.subr.bf16.mxu0 %v383
    %465 = vmatpush1.bf16.msra.mxu0 %v382
    %466 = vmatprep.subr.bf16.mxu0 %v381
    %467 = vmatpush1.bf16.msra.mxu0 %v380
    %468 = vmatprep.subr.bf16.mxu0 %v379
    %469 = vmatpush1.bf16.msra.mxu0 %v378
    %470 = vmatprep.subr.bf16.mxu0 %v377
    %471 = vmatpush1.bf16.msra.mxu0 %v376
    %472 = vmatprep.subr.bf16.mxu0 %v375
    %473 = vmatpush1.bf16.msra.mxu0 %v374
    %474 = vmatprep.subr.bf16.mxu0 %v373
    %475 = vmatpush1.bf16.msra.mxu0 %v372
    %476 = vmatprep.subr.bf16.mxu0 %v371
    %477 = vmatpush1.bf16.msra.mxu0 %v370
    %478 = vmatprep.subr.bf16.mxu0 %v369
    %479 = vmatpush1.bf16.msra.mxu0 %v368
    %480 = vmatprep.subr.bf16.mxu0 %v399
    %481 = vmatpush2.bf16.msra.mxu0 %v398
    %482 = vmatprep.subr.bf16.mxu0 %v397
    %483 = vmatpush2.bf16.msra.mxu0 %v396
    %484 = vmatprep.subr.bf16.mxu0 %v395
    %485 = vmatpush2.bf16.msra.mxu0 %v394
    %486 = vmatprep.subr.bf16.mxu0 %v393
    %487 = vmatpush2.bf16.msra.mxu0 %v392
    %488 = vmatprep.subr.bf16.mxu0 %v391
    %489 = vmatpush2.bf16.msra.mxu0 %v390
    %490 = vmatprep.subr.bf16.mxu0 %v389
    %491 = vmatpush2.bf16.msra.mxu0 %v388
    %492 = vmatprep.subr.bf16.mxu0 %v387
    %493 = vmatpush2.bf16.msra.mxu0 %v386
    %494 = vmatprep.subr.bf16.mxu0 %v385
    %495 = vmatpush2.bf16.msra.mxu0 %v384
    %496 = vmatprep.mubr.bf16.mxu0 %v171
    %497 = vmatmul.mubr.bf16.gmra.mxu0 %v170
    %v498 = vpop.f32.mrf.mxu0
    %v499 = vadd.f32 0.0, %v498
    %v500 = vpop.f32.mrf.mxu0
    %v501 = vadd.f32 0.0, %v500
    %v502 = vpop.f32.mrf.mxu0
    %v503 = vadd.f32 0.0, %v502
    %v504 = vpop.f32.mrf.mxu0
    %v505 = vadd.f32 0.0, %v504
    %506 = vmatprep.mubr.bf16.mxu0 %v174
    %507 = vmatmul.mubr.bf16.gmra.mxu0 %v173
    %v508 = vpop.f32.mrf.mxu0
    %v509 = vadd.f32 0.0, %v508
    %v510 = vpop.f32.mrf.mxu0
    %v511 = vadd.f32 0.0, %v510
    %v512 = vpop.f32.mrf.mxu0
    %v513 = vadd.f32 0.0, %v512
    %v514 = vpop.f32.mrf.mxu0
    %v515 = vadd.f32 0.0, %v514
    %516 = vdwg.mxu0
    %517 = vmatprep.subr.bf16.mxu0 %v415
    %518 = vmatpush1.bf16.msra.mxu0 %v414
    %519 = vmatprep.subr.bf16.mxu0 %v413
    %520 = vmatpush1.bf16.msra.mxu0 %v412
    %521 = vmatprep.subr.bf16.mxu0 %v411
    %522 = vmatpush1.bf16.msra.mxu0 %v410
    %523 = vmatprep.subr.bf16.mxu0 %v409
    %524 = vmatpush1.bf16.msra.mxu0 %v408
    %525 = vmatprep.subr.bf16.mxu0 %v407
    %526 = vmatpush1.bf16.msra.mxu0 %v406
    %527 = vmatprep.subr.bf16.mxu0 %v405
    %528 = vmatpush1.bf16.msra.mxu0 %v404
    %529 = vmatprep.subr.bf16.mxu0 %v403
    %530 = vmatpush1.bf16.msra.mxu0 %v402
    %531 = vmatprep.subr.bf16.mxu0 %v401
    %532 = vmatpush1.bf16.msra.mxu0 %v400
    %533 = vmatprep.subr.bf16.mxu0 0
    %534 = vmatpush2.bf16.msra.mxu0 0
    %535 = vmatprep.subr.bf16.mxu0 0
    %536 = vmatpush2.bf16.msra.mxu0 0
    %537 = vmatprep.subr.bf16.mxu0 0
    %538 = vmatpush2.bf16.msra.mxu0 0
    %539 = vmatprep.subr.bf16.mxu0 0
    %540 = vmatpush2.bf16.msra.mxu0 0
    %541 = vmatprep.subr.bf16.mxu0 0
    %542 = vmatpush2.bf16.msra.mxu0 0
    %543 = vmatprep.subr.bf16.mxu0 0
    %544 = vmatpush2.bf16.msra.mxu0 0
    %545 = vmatprep.subr.bf16.mxu0 0
    %546 = vmatpush2.bf16.msra.mxu0 0
    %547 = vmatprep.subr.bf16.mxu0 0
    %548 = vmatpush2.bf16.msra.mxu0 0
    %549 = vmatprep.mubr.bf16.mxu0 0
    %550 = vmatmul.mubr.bf16.gmra.mxu0 %v172
    %v551 = vpop.f32.mrf.mxu0
    %v552 = vadd.f32 %v499, %v551
    %v553 = vpop.f32.mrf.mxu0
    %v554 = vadd.f32 %v501, %v553
    %v555 = vpop.f32.mrf.mxu0
    %v556 = vadd.f32 %v503, %v555
    %v557 = vpop.f32.mrf.mxu0
    %v558 = vadd.f32 %v505, %v557
    %559 = vmatprep.mubr.bf16.mxu0 0
    %560 = vmatmul.mubr.bf16.gmra.mxu0 %v175
    %v561 = vpop.f32.mrf.mxu0
    %v562 = vadd.f32 %v509, %v561
    %v563 = vpop.f32.mrf.mxu0
    %v564 = vadd.f32 %v511, %v563
    %v565 = vpop.f32.mrf.mxu0
    %v566 = vadd.f32 %v513, %v565
    %v567 = vpop.f32.mrf.mxu0
    %v568 = vadd.f32 %v515, %v567
    %569 = vdwg.mxu0
    %v570 = vld [vmem:[%s2] sm:$0x1]
    %v572 = vlaneseq
    %v573 = vshrl.u32 %v572, 7
    %v574 = vsub.s32 0, %v573
    %v575 = vrot.slane %v570, %v574
    %v577 = vadd.f32 %v552, %v575
    %v578 = vadd.f32 %v556, %v575
    %v579 = vadd.f32 %v562, %v575
    %v580 = vadd.f32 %v566, %v575
    %v581 = vmax.f32 %v577, 0.0
    %v582 = vmax.f32 %v578, 0.0
    %v583 = vmax.f32 %v579, 0.0
    %v584 = vmax.f32 %v580, 0.0
    %v585 = vrot.slane %v581, 7
    %v586 = vrot.slane %v582, 7
    %v587 = vrot.slane %v583, 7
    %v588 = vrot.slane %v584, 7
    %v589 = vsel %vm128, %v587, %v588
    %v590 = vsel %vm128, %v586, %v587
    %v591 = vsel %vm128, %v585, %v586
    %v592 = vsel %vm128, %v588, %v585
    %v593 = vsel %vm137, %v592, 0.0
    %v594 = vsel %vm138, %v591, 0.0
    %v595 = vsel %vm139, %v590, 0.0
    %v596 = vsel %vm140, %v589, 0.0
    %v597 = vrot.slane %v581, 1
    %v598 = vrot.slane %v582, 1
    %v599 = vrot.slane %v583, 1
    %v600 = vrot.slane %v584, 1
    %v601 = vsel %vm153, %v599, %v600
    %v602 = vsel %vm153, %v598, %v599
    %v603 = vsel %vm153, %v597, %v598
    %v604 = vsel %vm153, %v600, %v597
    %v605 = vsel %vm162, %v603, 0.0
    %v606 = vsel %vm163, %v602, 0.0
    %v607 = vsel %vm164, %v601, 0.0
    %v608 = vsel %vm165, %v604, 0.0
    %v609 = vpack.c.bf16 %v594, %v593
    %v610 = vpack.c.bf16 %v582, %v581
    %v611 = vpack.c.bf16 %v606, %v605
    %v612 = vpack.c.bf16 %v596, %v595
    %v613 = vpack.c.bf16 %v584, %v583
    %v614 = vpack.c.bf16 %v608, %v607
    %v615 = vld [vmem:[#allocation7] sm:$0xf]
    %v616 = vld [vmem:[#allocation7 + $0x4] sm:$0xf]
    %v617 = vld [vmem:[#allocation7 + $0x8] sm:$0xf]
    %v618 = vld [vmem:[#allocation7 + $0xc] sm:$0xf]
    %v619 = vld [vmem:[#allocation7 + $0x10] sm:$0xf]
    %v620 = vld [vmem:[#allocation7 + $0x14] sm:$0xf]
    %v621 = vld [vmem:[#allocation7 + $0x18] sm:$0xf]
    %v622 = vld [vmem:[#allocation7 + $0x1c] sm:$0xf]
    %v623 = vld [vmem:[#allocation7 + $0x20] sm:$0xf]
    %v624 = vld [vmem:[#allocation7 + $0x24] sm:$0xf]
    %v625 = vld [vmem:[#allocation7 + $0x28] sm:$0xf]
    %v626 = vld [vmem:[#allocation7 + $0x2c] sm:$0xf]
    %v627 = vld [vmem:[#allocation7 + $0x30] sm:$0xf]
    %v628 = vld [vmem:[#allocation7 + $0x34] sm:$0xf]
    %v629 = vld [vmem:[#allocation7 + $0x38] sm:$0xf]
    %v630 = vld [vmem:[#allocation7 + $0x3c] sm:$0xf]
    %v631 = vld [vmem:[#allocation7 + $0x40] sm:$0xf]
    %v632 = vld [vmem:[#allocation7 + $0x44] sm:$0xf]
    %v633 = vld [vmem:[#allocation7 + $0x48] sm:$0xf]
    %v634 = vld [vmem:[#allocation7 + $0x4c] sm:$0xf]
    %v635 = vld [vmem:[#allocation7 + $0x50] sm:$0xf]
    %v636 = vld [vmem:[#allocation7 + $0x54] sm:$0xf]
    %v637 = vld [vmem:[#allocation7 + $0x58] sm:$0xf]
    %v638 = vld [vmem:[#allocation7 + $0x5c] sm:$0xf]
    %v639 = vld [vmem:[#allocation7 + $0x60] sm:$0xf]
    %v640 = vld [vmem:[#allocation7 + $0x64] sm:$0xf]
    %v641 = vld [vmem:[#allocation7 + $0x68] sm:$0xf]
    %v642 = vld [vmem:[#allocation7 + $0x6c] sm:$0xf]
    %v643 = vld [vmem:[#allocation7 + $0x70] sm:$0xf]
    %v644 = vld [vmem:[#allocation7 + $0x74] sm:$0xf]
    %v645 = vld [vmem:[#allocation7 + $0x78] sm:$0xf]
    %v646 = vld [vmem:[#allocation7 + $0x7c] sm:$0xf]
    %v647 = vld [vmem:[#allocation7 + $0x80] sm:$0xf]
    %v648 = vld [vmem:[#allocation7 + $0x84] sm:$0xf]
    %v649 = vld [vmem:[#allocation7 + $0x88] sm:$0xf]
    %v650 = vld [vmem:[#allocation7 + $0x8c] sm:$0xf]
    %v651 = vld [vmem:[#allocation7 + $0x90] sm:$0xf]
    %v652 = vld [vmem:[#allocation7 + $0x94] sm:$0xf]
    %v653 = vld [vmem:[#allocation7 + $0x98] sm:$0xf]
    %v654 = vld [vmem:[#allocation7 + $0x9c] sm:$0xf]
    %v655 = vld [vmem:[#allocation7 + $0xa0] sm:$0xf]
    %v656 = vld [vmem:[#allocation7 + $0xa4] sm:$0xf]
    %v657 = vld [vmem:[#allocation7 + $0xa8] sm:$0xf]
    %v658 = vld [vmem:[#allocation7 + $0xac] sm:$0xf]
    %v659 = vld [vmem:[#allocation7 + $0xb0] sm:$0xf]
    %v660 = vld [vmem:[#allocation7 + $0xb4] sm:$0xf]
    %v661 = vld [vmem:[#allocation7 + $0xb8] sm:$0xf]
    %v662 = vld [vmem:[#allocation7 + $0xbc] sm:$0xf]
    %v711 = vunpack.c.l.b16 %v615
    %v712 = vunpack.c.l.b16 %v616
    %v713 = vunpack.c.l.b16 %v617
    %v714 = vunpack.c.l.b16 %v618
    %v715 = vunpack.c.l.b16 %v619
    %v716 = vunpack.c.l.b16 %v620
    %v717 = vunpack.c.l.b16 %v621
    %v718 = vunpack.c.l.b16 %v622
    %v719 = vunpack.c.l.b16 %v623
    %v720 = vunpack.c.l.b16 %v624
    %v721 = vunpack.c.l.b16 %v625
    %v722 = vunpack.c.l.b16 %v626
    %v723 = vunpack.c.l.b16 %v627
    %v724 = vunpack.c.l.b16 %v628
    %v725 = vunpack.c.l.b16 %v629
    %v726 = vunpack.c.l.b16 %v630
    %v727 = vunpack.c.l.b16 %v631
    %v728 = vunpack.c.l.b16 %v632
    %v729 = vunpack.c.l.b16 %v633
    %v730 = vunpack.c.l.b16 %v634
    %v731 = vunpack.c.l.b16 %v635
    %v732 = vunpack.c.l.b16 %v636
    %v733 = vunpack.c.l.b16 %v637
    %v734 = vunpack.c.l.b16 %v638
    %v735 = vunpack.c.l.b16 %v639
    %v736 = vunpack.c.l.b16 %v640
    %v737 = vunpack.c.l.b16 %v641
    %v738 = vunpack.c.l.b16 %v642
    %v739 = vunpack.c.l.b16 %v643
    %v740 = vunpack.c.l.b16 %v644
    %v741 = vunpack.c.l.b16 %v645
    %v742 = vunpack.c.l.b16 %v646
    %v743 = vunpack.c.l.b16 %v647
    %v744 = vunpack.c.l.b16 %v648
    %v745 = vunpack.c.l.b16 %v649
    %v746 = vunpack.c.l.b16 %v650
    %v747 = vunpack.c.l.b16 %v651
    %v748 = vunpack.c.l.b16 %v652
    %v749 = vunpack.c.l.b16 %v653
    %v750 = vunpack.c.l.b16 %v654
    %v751 = vunpack.c.l.b16 %v655
    %v752 = vunpack.c.l.b16 %v656
    %v753 = vunpack.c.l.b16 %v657
    %v754 = vunpack.c.l.b16 %v658
    %v755 = vunpack.c.l.b16 %v659
    %v756 = vunpack.c.l.b16 %v660
    %v757 = vunpack.c.l.b16 %v661
    %v758 = vunpack.c.l.b16 %v662
    %v759 = vpack.c.b16 %v712, %v711
    %v760 = vpack.c.b16 %v714, %v713
    %v761 = vpack.c.b16 %v716, %v715
    %v762 = vpack.c.b16 %v718, %v717
    %v763 = vpack.c.b16 %v720, %v719
    %v764 = vpack.c.b16 %v722, %v721
    %v765 = vpack.c.b16 %v724, %v723
    %v766 = vpack.c.b16 %v726, %v725
    %v767 = vpack.c.b16 %v728, %v727
    %v768 = vpack.c.b16 %v730, %v729
    %v769 = vpack.c.b16 %v732, %v731
    %v770 = vpack.c.b16 %v734, %v733
    %v771 = vpack.c.b16 %v736, %v735
    %v772 = vpack.c.b16 %v738, %v737
    %v773 = vpack.c.b16 %v740, %v739
    %v774 = vpack.c.b16 %v742, %v741
    %v775 = vpack.c.b16 %v744, %v743
    %v776 = vpack.c.b16 %v746, %v745
    %v777 = vpack.c.b16 %v748, %v747
    %v778 = vpack.c.b16 %v750, %v749
    %v779 = vpack.c.b16 %v752, %v751
    %v780 = vpack.c.b16 %v754, %v753
    %v781 = vpack.c.b16 %v756, %v755
    %v782 = vpack.c.b16 %v758, %v757
    %807 = vmatprep.subr.bf16.mxu0 0
    %808 = vmatpush1.bf16.msra.mxu0 %v766
    %809 = vmatprep.subr.bf16.mxu0 0
    %810 = vmatpush1.bf16.msra.mxu0 %v765
    %811 = vmatprep.subr.bf16.mxu0 0
    %812 = vmatpush1.bf16.msra.mxu0 %v764
    %813 = vmatprep.subr.bf16.mxu0 0
    %814 = vmatpush1.bf16.msra.mxu0 %v763
    %815 = vmatprep.subr.bf16.mxu0 0
    %816 = vmatpush1.bf16.msra.mxu0 %v762
    %817 = vmatprep.subr.bf16.mxu0 0
    %818 = vmatpush1.bf16.msra.mxu0 %v761
    %819 = vmatprep.subr.bf16.mxu0 0
    %820 = vmatpush1.bf16.msra.mxu0 %v760
    %821 = vmatprep.subr.bf16.mxu0 0
    %822 = vmatpush1.bf16.msra.mxu0 %v759
    %823 = vmatprep.subr.bf16.mxu0 0
    %824 = vmatpush2.bf16.msra.mxu0 %v774
    %825 = vmatprep.subr.bf16.mxu0 0
    %826 = vmatpush2.bf16.msra.mxu0 %v773
    %827 = vmatprep.subr.bf16.mxu0 0
    %828 = vmatpush2.bf16.msra.mxu0 %v772
    %829 = vmatprep.subr.bf16.mxu0 0
    %830 = vmatpush2.bf16.msra.mxu0 %v771
    %831 = vmatprep.subr.bf16.mxu0 0
    %832 = vmatpush2.bf16.msra.mxu0 %v770
    %833 = vmatprep.subr.bf16.mxu0 0
    %834 = vmatpush2.bf16.msra.mxu0 %v769
    %835 = vmatprep.subr.bf16.mxu0 0
    %836 = vmatpush2.bf16.msra.mxu0 %v768
    %837 = vmatprep.subr.bf16.mxu0 0
    %838 = vmatpush2.bf16.msra.mxu0 %v767
    %839 = vmatprep.mubr.bf16.mxu0 %v610
    %840 = vmatmul.mubr.bf16.gmra.mxu0 %v609
    %v841 = vpop.f32.mrf.mxu0
    %v842 = vadd.f32 %v554, %v841
    %v843 = vpop.f32.mrf.mxu0
    %v844 = vpop.f32.mrf.mxu0
    %v845 = vadd.f32 %v558, %v844
    %v846 = vpop.f32.mrf.mxu0
    %847 = vmatprep.mubr.bf16.mxu0 %v613
    %848 = vmatmul.mubr.bf16.gmra.mxu0 %v612
    %v849 = vpop.f32.mrf.mxu0
    %v850 = vadd.f32 %v564, %v849
    %v851 = vpop.f32.mrf.mxu0
    %v852 = vpop.f32.mrf.mxu0
    %v853 = vadd.f32 %v568, %v852
    %v854 = vpop.f32.mrf.mxu0
    %855 = vdwg.mxu0
    %856 = vmatprep.subr.bf16.mxu0 0
    %857 = vmatpush1.bf16.msra.mxu0 %v782
    %858 = vmatprep.subr.bf16.mxu0 0
    %859 = vmatpush1.bf16.msra.mxu0 %v781
    %860 = vmatprep.subr.bf16.mxu0 0
    %861 = vmatpush1.bf16.msra.mxu0 %v780
    %862 = vmatprep.subr.bf16.mxu0 0
    %863 = vmatpush1.bf16.msra.mxu0 %v779
    %864 = vmatprep.subr.bf16.mxu0 0
    %865 = vmatpush1.bf16.msra.mxu0 %v778
    %866 = vmatprep.subr.bf16.mxu0 0
    %867 = vmatpush1.bf16.msra.mxu0 %v777
    %868 = vmatprep.subr.bf16.mxu0 0
    %869 = vmatpush1.bf16.msra.mxu0 %v776
    %870 = vmatprep.subr.bf16.mxu0 0
    %871 = vmatpush1.bf16.msra.mxu0 %v775
    %872 = vmatprep.subr.bf16.mxu0 0
    %873 = vmatpush2.bf16.msra.mxu0 0
    %874 = vmatprep.subr.bf16.mxu0 0
    %875 = vmatpush2.bf16.msra.mxu0 0
    %876 = vmatprep.subr.bf16.mxu0 0
    %877 = vmatpush2.bf16.msra.mxu0 0
    %878 = vmatprep.subr.bf16.mxu0 0
    %879 = vmatpush2.bf16.msra.mxu0 0
    %880 = vmatprep.subr.bf16.mxu0 0
    %881 = vmatpush2.bf16.msra.mxu0 0
    %882 = vmatprep.subr.bf16.mxu0 0
    %883 = vmatpush2.bf16.msra.mxu0 0
    %884 = vmatprep.subr.bf16.mxu0 0
    %885 = vmatpush2.bf16.msra.mxu0 0
    %886 = vmatprep.subr.bf16.mxu0 0
    %887 = vmatpush2.bf16.msra.mxu0 0
    %888 = vmatprep.mubr.bf16.mxu0 0
    %889 = vmatmul.mubr.bf16.gmra.mxu0 %v611
    %v890 = vpop.f32.mrf.mxu0
    %v891 = vadd.f32 %v842, %v890
    %v892 = vpop.f32.mrf.mxu0
    %v893 = vpop.f32.mrf.mxu0
    %v894 = vadd.f32 %v845, %v893
    %v895 = vpop.f32.mrf.mxu0
    %896 = vmatprep.mubr.bf16.mxu0 0
    %897 = vmatmul.mubr.bf16.gmra.mxu0 %v614
    %v898 = vpop.f32.mrf.mxu0
    %v899 = vadd.f32 %v850, %v898
    %v900 = vpop.f32.mrf.mxu0
    %v901 = vpop.f32.mrf.mxu0
    %v902 = vadd.f32 %v853, %v901
    %v903 = vpop.f32.mrf.mxu0
    %904 = vdwg.mxu0
    %v905 = vld [vmem:[%s4] sm:$0x1]
    %v907 = vlaneseq
    %v908 = vshrl.u32 %v907, 7
    %v909 = vsub.s32 0, %v908
    %v910 = vrot.slane %v905, %v909
    %v912 = vadd.f32 %v891, %v910
    %v913 = vadd.f32 %v894, %v910
    %v914 = vadd.f32 %v899, %v910
    %v915 = vadd.f32 %v902, %v910
    %v916 = vmax.f32 %v912, 0.0
    %v917 = vmax.f32 %v913, 0.0
    %v918 = vmax.f32 %v914, 0.0
    %v919 = vmax.f32 %v915, 0.0
    %920 = vst [vmem:[#allocation8] sm:$0xff] %v916
    %921 = vst [vmem:[#allocation8 + $0x8] sm:$0xff] %v917
    %922 = vst [vmem:[#allocation8 + $0x10] sm:$0xff] %v918
    %923 = vst [vmem:[#allocation8 + $0x18] sm:$0xff] %v919
    // Predicated region
    $region34: #{tpu_custom_call.1} parent=1 // pred_check
      _
    $region35: #{tpu_custom_call.1} parent=1 // pred_check_branch
      %925 = sbr.rel (0) target = $region37
    $region36: #{tpu_custom_call.1} parent=1 // pred_region
      %s927 = ssub.s32 512, 512
      %928 = vsyncadd [#allocation4], %s927
      %s929 = sshll.u32 [#allocation8], 4
      %s930 = int_to_ptr.vmem [resolvable:$true] %s929
      %935 = dma.vmem_to_hbm [thread:$0]  %s930, 512, %s5, [#allocation4], 128, 128, 8
    $region37: #{tpu_custom_call.1} parent=1 // pred_fallthru
      _
    // Predicated region
    $region38: #{tpu_custom_call.1} parent=1 // pred_check
      _
    $region39: #{tpu_custom_call.1} parent=1 // pred_check_branch
      %937 = sbr.rel (0) target = $region41
    $region40: #{tpu_custom_call.1} parent=1 // pred_region
      %938 = dma.done [#allocation4], 512
    $region41: #{tpu_custom_call.1} parent=1 // pred_fallthru
      _
    %939 = vsyncpa [#allocation3], 1
    %940 = vsyncpa [#allocation6], 1
    %941 = vsyncpa [#allocation4], 1

</llo_original>
